<compile_context>
chip_gen: v5e
topology: v5e:2x2
jax: 0.10.0
libtpu: 0.0.40
codegen_flags: <defaults>
</compile_context>

<pallas_src>
import jax
import jax.numpy as jnp
from jax.experimental import pallas as pl
from jax.experimental.pallas import tpu as pltpu


def _round_up(x, m):
    return (x + m - 1) // m * m


def toy_mlp_kernel(xT_ref, w1_ref, b1_ref, w2_ref, b2_ref, oT_ref):
    # Fused MLP on a lane-dense [feat, batch_block] tile:
    #   h = relu(W1 @ xT + b1);  o = W2 @ h + b2
    xT = xT_ref[...]                                                 # [d_in,  n]
    h = jnp.dot(w1_ref[...], xT, preferred_element_type=jnp.float32) + b1_ref[...]
    h = jnp.maximum(h, 0.0)                                          # ReLU (VPU)
    o = jnp.dot(w2_ref[...], h, preferred_element_type=jnp.float32) + b2_ref[...]
    oT_ref[...] = o.astype(oT_ref.dtype)                            # [d_out, n]


def _cost_estimate(B, d_in, d_hid, d_out, itemsize):
    flops = 2 * B * d_in * d_hid + 2 * B * d_hid * d_out
    bytes_accessed = (
        B * (d_in + d_out) * itemsize
        + (d_hid * d_in + d_hid + d_out * d_hid + d_out) * 4
    )
    return pl.CostEstimate(flops=flops, transcendentals=0,
                           bytes_accessed=bytes_accessed)


def toy_model_forward(x, w1, b1, w2, b2, *, block_n=32768, single_shot_max=4096):
    """x: [B, 10]; w1: [10, 10] (out,in); b1: [10, 1]; w2: [5, 10]; b2: [5, 1].

    Returns [B, 5], matching ToyModel.forward semantics.
    """
    B, d_in = x.shape
    d_hid = w1.shape[0]
    d_out = w2.shape[0]
    cost = _cost_estimate(B, d_in, d_hid, d_out, x.dtype.itemsize)
    vmem = pltpu.MemorySpace.VMEM

    # Batch onto the lane axis (lane-dense loads/stores inside the kernel).
    xT = x.T                                                         # [d_in, B]

    if B <= single_shot_max:
        # Small batch: single un-gridded invocation, everything resident in VMEM,
        # zero pipeline/grid overhead.
        oT = pl.pallas_call(
            toy_mlp_kernel,
            out_shape=jax.ShapeDtypeStruct((d_out, B), x.dtype),
            in_specs=[pl.BlockSpec(memory_space=vmem)] * 5,
            out_specs=pl.BlockSpec(memory_space=vmem),
            cost_estimate=cost,
        )(xT, w1, b1, w2, b2)
        return oT.T

    # Gridded path: tile the lane (batch) axis.  Keep >=2 blocks when possible so
    # the "parallel" grid axis can shard across v7x's two TensorCores.
    bn = max(128, min(block_n, _round_up(pl.cdiv(B, 2), 128)))
    grid = (pl.cdiv(B, bn),)  # uneven trailing block handled by Pallas (no pad copy)

    # Per-block VMEM footprint (f32, sublane-padded, x2 double-buffering on the
    # streamed operands); cap the limit at 32 MiB — safe on v5e/v6e/v7x.
    need = (2 * _round_up(d_in, 8) + _round_up(d_hid, 8)
            + 2 * _round_up(d_out, 8)) * bn * 4
    vmem_limit = int(min(max(2 * need, 16 << 20), 32 << 20))

    oT = pl.pallas_call(
        toy_mlp_kernel,
        out_shape=jax.ShapeDtypeStruct((d_out, B), x.dtype),
        grid=grid,
        in_specs=[
            pl.BlockSpec((d_in, bn), lambda i: (0, i)),     # x block, lane-dense
            pl.BlockSpec((d_hid, d_in), lambda i: (0, 0)),  # W1 resident
            pl.BlockSpec((d_hid, 1), lambda i: (0, 0)),     # b1 resident
            pl.BlockSpec((d_out, d_hid), lambda i: (0, 0)), # W2 resident
            pl.BlockSpec((d_out, 1), lambda i: (0, 0)),     # b2 resident
        ],
        out_specs=pl.BlockSpec((d_out, bn), lambda i: (0, i)),  # lane-dense output
        compiler_params=pltpu.CompilerParams(
            dimension_semantics=("parallel",),
            vmem_limit_bytes=vmem_limit,
        ),
        cost_estimate=cost,
    )(xT, w1, b1, w2, b2)
    return oT.T


def init_params(key):
    """Deterministic init mimicking nn.Linear's U(-1/sqrt(fan_in), 1/sqrt(fan_in)).

    Weights kept in PyTorch's [out_features, in_features] layout; biases [out, 1].
    """
    k1, k2, k3, k4 = jax.random.split(key, 4)
    bound = 1.0 / jnp.sqrt(10.0)
    w1 = jax.random.uniform(k1, (10, 10), jnp.float32, -bound, bound)
    b1 = jax.random.uniform(k2, (10, 1), jnp.float32, -bound, bound)
    w2 = jax.random.uniform(k3, (5, 10), jnp.float32, -bound, bound)
    b2 = jax.random.uniform(k4, (5, 1), jnp.float32, -bound, bound)
    return w1, b1, w2, b2


def _reference(x, w1, b1, w2, b2):
    h = jnp.maximum(x @ w1.T + b1[:, 0], 0.0)
    return h @ w2.T + b2[:, 0]


if __name__ == "__main__":
    key = jax.random.PRNGKey(0)
    kp, kx1, kx2 = jax.random.split(key, 3)
    w1, b1, w2, b2 = init_params(kp)

    # Path 1: small batch -> single un-gridded, fully VMEM-resident call.
    B1 = 8
    x1 = jax.random.normal(kx1, (B1, 10), dtype=jnp.float32)
    out1 = jax.block_until_ready(toy_model_forward(x1, w1, b1, w2, b2))
    assert out1.shape == (B1, 5)
    assert jnp.allclose(out1, _reference(x1, w1, b1, w2, b2), atol=1e-5, rtol=1e-5)

    # Path 2: gridded, lane-tiled batch with an uneven trailing block (no pad copy).
    # Small shapes but forces the gridded code path via explicit thresholds.
    B2 = 300
    x2 = jax.random.normal(kx2, (B2, 10), dtype=jnp.float32)
    out2 = jax.block_until_ready(
        toy_model_forward(x2, w1, b1, w2, b2, block_n=128, single_shot_max=64))
    assert out2.shape == (B2, 5)
    assert jnp.allclose(out2, _reference(x2, w1, b1, w2, b2), atol=1e-5, rtol=1e-5)

    print("KERNEL_OK")
</pallas_src>

<mosaic_0001>
module attributes {stable_mosaic.version = 11 : i64} {
  func.func @toy_mlp_kernel(%arg0: memref<10x8xf32, #tpu.memory_space<vmem>>, %arg1: memref<10x10xf32, #tpu.memory_space<vmem>>, %arg2: memref<10x1xf32, #tpu.memory_space<vmem>>, %arg3: memref<5x10xf32, #tpu.memory_space<vmem>>, %arg4: memref<5x1xf32, #tpu.memory_space<vmem>>, %arg5: memref<5x8xf32, #tpu.memory_space<vmem>>) attributes {dimension_semantics = [], scalar_prefetch = 0 : i64, scratch_operands = 0 : i64, tpu.core_type = #tpu.core_type<tc>} {
    %c0 = arith.constant 0 : index
    %c0_0 = arith.constant 0 : index
    %0 = vector.load %arg0[%c0, %c0_0] : memref<10x8xf32, #tpu.memory_space<vmem>>, vector<10x8xf32>
    %c0_1 = arith.constant 0 : index
    %c0_2 = arith.constant 0 : index
    %1 = vector.load %arg1[%c0_1, %c0_2] : memref<10x10xf32, #tpu.memory_space<vmem>>, vector<10x10xf32>
    %cst = arith.constant dense<0.000000e+00> : vector<10x8xf32>
    %2 = tpu.matmul %1, %0, %cst {dimension_numbers = #tpu.dot_dimension_numbers<[1], [0], [0], [1], [0, 0, 1, 1], [], []>} : vector<10x10xf32>, vector<10x8xf32>, vector<10x8xf32> -> vector<10x8xf32>
    %c0_3 = arith.constant 0 : index
    %c0_4 = arith.constant 0 : index
    %3 = vector.load %arg2[%c0_3, %c0_4] : memref<10x1xf32, #tpu.memory_space<vmem>>, vector<10x1xf32>
    %4 = vector.broadcast %3 : vector<10x1xf32> to vector<10x8xf32>
    %5 = arith.addf %2, %4 : vector<10x8xf32>
    %cst_5 = arith.constant 0.000000e+00 : f32
    %6 = vector.broadcast %cst_5 : f32 to vector<10x8xf32>
    %7 = arith.maximumf %5, %6 : vector<10x8xf32>
    %c0_6 = arith.constant 0 : index
    %c0_7 = arith.constant 0 : index
    %8 = vector.load %arg3[%c0_6, %c0_7] : memref<5x10xf32, #tpu.memory_space<vmem>>, vector<5x10xf32>
    %cst_8 = arith.constant dense<0.000000e+00> : vector<5x8xf32>
    %9 = tpu.matmul %8, %7, %cst_8 {dimension_numbers = #tpu.dot_dimension_numbers<[1], [0], [0], [1], [0, 0, 1, 1], [], []>} : vector<5x10xf32>, vector<10x8xf32>, vector<5x8xf32> -> vector<5x8xf32>
    %c0_9 = arith.constant 0 : index
    %c0_10 = arith.constant 0 : index
    %10 = vector.load %arg4[%c0_9, %c0_10] : memref<5x1xf32, #tpu.memory_space<vmem>>, vector<5x1xf32>
    %11 = vector.broadcast %10 : vector<5x1xf32> to vector<5x8xf32>
    %12 = arith.addf %9, %11 : vector<5x8xf32>
    %c0_11 = arith.constant 0 : index
    %c0_12 = arith.constant 0 : index
    %13 = vector.load %arg5[%c0_11, %c0_12] : memref<5x8xf32, #tpu.memory_space<vmem>>, vector<5x8xf32>
    tpu.vector_store %arg5[%c0_11, %c0_12], %12 {strides = array<i32>} : memref<5x8xf32, #tpu.memory_space<vmem>>, vector<5x8xf32>,
    return
  }
}

</mosaic_0001>

<llo_original>
// kernel: tpu_custom_call.1
$region0: #{tpu_custom_call.1}
  #allocation0 [shape = 'u32[]', space=smem, size = 0x4, offset = 0x4, fixed_abs, tag = 'smem constant byte address 0x4 - core index']
  #allocation1 [shape = 'u32[72,128]{1,0:T(1,128)}', space=vmem, size = 0x9000, scoped, tag = 'internal scratch']
  %s0 = inlined_call_operand.vmem [shape: f32[10,8], index: 0, kind: input, shape index: {}]
  %s1 = inlined_call_operand.vmem [shape: f32[10,10], index: 1, kind: input, shape index: {}]
  %s2 = inlined_call_operand.vmem [shape: f32[10,1], index: 2, kind: input, shape index: {}]
  %s3 = inlined_call_operand.vmem [shape: f32[5,10], index: 3, kind: input, shape index: {}]
  %s4 = inlined_call_operand.vmem [shape: f32[5,1], index: 4, kind: input, shape index: {}]
  %s5 = inlined_call_operand.hbm [shape: f32[5,8], index: 5, kind: output, shape index: {}]
  %s6 = sld [smem:[#allocation0]]
  $region30: #{tpu_custom_call.1} parent=0
    _
  %s8 = ssub.s32 1, %s6
  %s9 = scalar_select 0, %s8, %s6
  $region1: #{tpu_custom_call.1} parent=0
    #allocation2 [shape = 'u8[4096]{0}', space=vmem, size = 0x1000, scoped, tag = 'output window, operand 0, single buffered']
    #allocation3 [shape = 's32[1]{0}', space=sflag, size = 0x4, scoped, tag = 'scoped memory for tpu_custom_call.1']
    %10 = vsyncpa [#allocation3], 0
    // Predicated region
    $region2: #{tpu_custom_call.1} parent=1 // pred_check
      _
    $region3: #{tpu_custom_call.1} parent=1 // pred_check_branch
      %12 = sbr.rel (0) target = $region5
    $region4: #{tpu_custom_call.1} parent=1 // pred_region
      _
    $region5: #{tpu_custom_call.1} parent=1 // pred_fallthru
      _
    // Predicated region
    $region6: #{tpu_custom_call.1} parent=1 // pred_check
      _
    $region7: #{tpu_custom_call.1} parent=1 // pred_check_branch
      %14 = sbr.rel (0) target = $region9
    $region8: #{tpu_custom_call.1} parent=1 // pred_region
      _
    $region9: #{tpu_custom_call.1} parent=1 // pred_fallthru
      _
    // Predicated region
    $region10: #{tpu_custom_call.1} parent=1 // pred_check
      _
    $region11: #{tpu_custom_call.1} parent=1 // pred_check_branch
      %16 = sbr.rel (0) target = $region13
    $region12: #{tpu_custom_call.1} parent=1 // pred_region
      _
    $region13: #{tpu_custom_call.1} parent=1 // pred_fallthru
      _
    // Predicated region
    $region14: #{tpu_custom_call.1} parent=1 // pred_check
      _
    $region15: #{tpu_custom_call.1} parent=1 // pred_check_branch
      %18 = sbr.rel (0) target = $region17
    $region16: #{tpu_custom_call.1} parent=1 // pred_region
      _
    $region17: #{tpu_custom_call.1} parent=1 // pred_fallthru
      _
    // Predicated region
    $region18: #{tpu_custom_call.1} parent=1 // pred_check
      _
    $region19: #{tpu_custom_call.1} parent=1 // pred_check_branch
      %20 = sbr.rel (0) target = $region21
    $region20: #{tpu_custom_call.1} parent=1 // pred_region
      _
    $region21: #{tpu_custom_call.1} parent=1 // pred_fallthru
      _
    %v21 = vld [vmem:[%s0] sm:$0xff]
    %v22 = vld [vmem:[%s0 + $0x8] sm:$0x3]
    %v23 = vld [vmem:[%s1] sm:$0xff]
    %v24 = vld [vmem:[%s1 + $0x8] sm:$0x3]
    %v25 = vld [vmem:[%s2] sm:$0xff]
    %v26 = vld [vmem:[%s2 + $0x8] sm:$0x3]
    %28 = vset.pattern.permute.xlu0 0
    %29 = vperm.xlu0 %28, %v25
    %v30 = vpop.permute.xlu0 %29
    %33 = vset.pattern.permute.xlu0 0
    %34 = vperm.xlu0 %33, %v26
    %v35 = vpop.permute.xlu0 %34
    %vm37 = vcmask 80896
    %v39 = vsel %vm37, %v23, 0
    %v42 = vsel %vm37, %v24, 0
    %vm44 = vcmask 1041408
    %v46 = vsel %vm44, %v22, 0
    %48 = vmatpush.msra.mxu0 0.0
    %49 = vmatpush.msra.mxu0 0.0
    %50 = vmatpush.msra.mxu0 0.0
    %51 = vmatpush.msra.mxu0 0.0
    %52 = vmatpush.msra.mxu0 0.0
    %53 = vmatpush.msra.mxu0 0.0
    %54 = vmatpush.msra.mxu0 0.0
    %55 = vmatpush.msra.mxu0 0.0
    %56 = vmatpush.msra.mxu0 0.0
    %57 = vmatpush.msra.mxu0 0.0
    %58 = vmatpush.msra.mxu0 0.0
    %59 = vmatpush.msra.mxu0 0.0
    %60 = vmatpush.msra.mxu0 0.0
    %61 = vmatpush.msra.mxu0 0.0
    %62 = vmatpush.msra.mxu0 %v46
    %63 = vmatpush.msra.mxu0 %v21
    %64 = vmatmul.f32.gmra.mxu0 %v39
    %v65 = vpop.f32.mrf.mxu0
    %v66 = vadd.f32 %v30, %v65
    %67 = vmatmul.f32.gmra.mxu0 %v42
    %v68 = vpop.f32.mrf.mxu0
    %v69 = vadd.f32 %v35, %v68
    %70 = vdwg.mxu0
    %v71 = vmax.f32 %v66, 0.0
    %v72 = vmax.f32 %v69, 0.0
    %v73 = vld [vmem:[%s3] sm:$0x1f]
    %v74 = vld [vmem:[%s4] sm:$0x1f]
    %76 = vset.pattern.permute.xlu0 0
    %77 = vperm.xlu0 %76, %v74
    %v78 = vpop.permute.xlu0 %77
    %v81 = vsel %vm37, %v73, 0
    %v84 = vsel %vm44, %v72, 0
    %86 = vmatpush.msra.mxu0 0.0
    %87 = vmatpush.msra.mxu0 0.0
    %88 = vmatpush.msra.mxu0 0.0
    %89 = vmatpush.msra.mxu0 0.0
    %90 = vmatpush.msra.mxu0 0.0
    %91 = vmatpush.msra.mxu0 0.0
    %92 = vmatpush.msra.mxu0 0.0
    %93 = vmatpush.msra.mxu0 0.0
    %94 = vmatpush.msra.mxu0 0.0
    %95 = vmatpush.msra.mxu0 0.0
    %96 = vmatpush.msra.mxu0 0.0
    %97 = vmatpush.msra.mxu0 0.0
    %98 = vmatpush.msra.mxu0 0.0
    %99 = vmatpush.msra.mxu0 0.0
    %100 = vmatpush.msra.mxu0 %v84
    %101 = vmatpush.msra.mxu0 %v71
    %102 = vmatmul.f32.gmra.mxu0 %v81
    %v103 = vpop.f32.mrf.mxu0
    %v104 = vadd.f32 %v78, %v103
    %105 = vdwg.mxu0
    %vm106 = vcmask 61440
    %107 = vst.msk [vmem:[#allocation2] sm:$0x1f] %vm106, %v104
    // Predicated region
    $region22: #{tpu_custom_call.1} parent=1 // pred_check
      _
    $region23: #{tpu_custom_call.1} parent=1 // pred_check_branch
      %109 = sbr.rel (0) target = $region25
    $region24: #{tpu_custom_call.1} parent=1 // pred_region
      %111 = vsyncadd [#allocation3], 0
      %s113 = sshll.u32 [#allocation2], 4
      %s114 = int_to_ptr.vmem [resolvable:$true] %s113
      %s115 = sshll.u32 %s5, 4
      %s116 = int_to_ptr.hbm [resolvable:$true] %s115
      %118 = dma.vmem_to_hbm [thread:$0]  %s114, 128, %s116, [#allocation3]
    $region25: #{tpu_custom_call.1} parent=1 // pred_fallthru
      _
    // Predicated region
    $region26: #{tpu_custom_call.1} parent=1 // pred_check
      _
    $region27: #{tpu_custom_call.1} parent=1 // pred_check_branch
      %120 = sbr.rel (0) target = $region29
    $region28: #{tpu_custom_call.1} parent=1 // pred_region
      %122 = dma.done [#allocation3], 128
    $region29: #{tpu_custom_call.1} parent=1 // pred_fallthru
      _
    %123 = vsyncpa [#allocation3], 1

</llo_original>
